<compile_context>
chip_gen: v5e
topology: v5e:2x2
jax: 0.10.0
libtpu: 0.0.40
codegen_flags: <defaults>
</compile_context>

<pallas_src>
import functools
import numpy as np
import jax
import jax.numpy as jnp
from jax.experimental import pallas as pl
from jax.experimental.pallas import tpu as pltpu


# --------------------------------------------------------------------------
# Pallas kernels
# --------------------------------------------------------------------------

def _pfn_kernel(x_ref, w_ref, o_ref, *, P):
    # x_ref: (V*P, F) pre-masked points, w_ref: (F, C); out: max_p relu(x @ w)
    V, C = o_ref.shape
    y = jnp.dot(x_ref[...], w_ref[...], preferred_element_type=jnp.float32)
    y = jnp.maximum(y, 0.0)                     # padded points give relu(0) = 0
    o_ref[...] = jnp.max(y.reshape(V, P, C), axis=1)


def pillar_vfe_pfn(points10, w_pfn):
    """points10: (V, P, 10) pre-masked; returns pillar features (V, C)."""
    V, P, F = points10.shape
    C = w_pfn.shape[1]
    x2d = points10.reshape(V * P, F).astype(jnp.float32)   # single MXU push
    return pl.pallas_call(
        functools.partial(_pfn_kernel, P=P),
        out_shape=jax.ShapeDtypeStruct((V, C), jnp.float32),
        grid=(1,),
        in_specs=[pl.BlockSpec((V * P, F), lambda i: (0, 0)),
                  pl.BlockSpec((F, C), lambda i: (0, 0))],
        out_specs=pl.BlockSpec((V, C), lambda i: (0, 0)),
    )(x2d, w_pfn.astype(jnp.float32))


def _backbone_kernel(x_ref, w1_ref, b1_ref, w2_ref, b2_ref, wsh_ref, bsh_ref,
                     o_ref, pad_scr, *, H, W):
    # x_ref: (1, H*W, C); w1/w2: (9, C, C); biases: (1, C); wsh: (C, C).
    # Fused: conv3x3+ReLU -> conv3x3+ReLU -> 1x1 shrink+ReLU, all VMEM resident.
    C = x_ref.shape[-1]
    HW = H * W

    pad_scr[...] = jnp.zeros_like(pad_scr)                 # (H+2, W+2, C) halo buffer
    pad_scr[1:H + 1, 1:W + 1, :] = x_ref[0].reshape(H, W, C)

    def conv3x3_relu(w_ref, b_ref):
        acc = jnp.broadcast_to(b_ref[...], (HW, C))        # hoisted bias broadcast
        for kidx in range(9):                              # static -> fully unrolled
            dh, dw = kidx // 3, kidx % 3
            patch = pad_scr[dh:dh + H, dw:dw + W, :].reshape(HW, C)
            acc = acc + jnp.dot(patch, w_ref[kidx],
                                preferred_element_type=jnp.float32)
        return jnp.maximum(acc, 0.0)

    x1 = conv3x3_relu(w1_ref, b1_ref)                      # conv1 + ReLU
    pad_scr[1:H + 1, 1:W + 1, :] = x1.reshape(H, W, C)     # reuse halo scratch
    x2 = conv3x3_relu(w2_ref, b2_ref)                      # conv2 + ReLU
    y = jnp.dot(x2, wsh_ref[...], preferred_element_type=jnp.float32) + bsh_ref[...]
    o_ref[0] = jnp.maximum(y, 0.0)                         # shrink 1x1 + ReLU


def backbone_shrink(spatial_features, H, W, w_bb1, b_bb1, w_bb2, b_bb2, w_sh, b_sh):
    """spatial_features: (N, H*W, C) -> spatial_features_2d: (N, H*W, C)."""
    N, HW, C = spatial_features.shape
    w1 = w_bb1.reshape(9, C, C).astype(jnp.float32)
    w2 = w_bb2.reshape(9, C, C).astype(jnp.float32)
    wsh = w_sh.reshape(C, C).astype(jnp.float32)
    b1 = b_bb1.reshape(1, C).astype(jnp.float32)
    b2 = b_bb2.reshape(1, C).astype(jnp.float32)
    bsh = b_sh.reshape(1, C).astype(jnp.float32)
    return pl.pallas_call(
        functools.partial(_backbone_kernel, H=H, W=W),
        out_shape=jax.ShapeDtypeStruct((N, HW, C), jnp.float32),
        grid=(N,),
        in_specs=[
            pl.BlockSpec((1, HW, C), lambda n: (n, 0, 0)),
            pl.BlockSpec((9, C, C), lambda n: (0, 0, 0)),   # weights stay resident
            pl.BlockSpec((1, C), lambda n: (0, 0)),
            pl.BlockSpec((9, C, C), lambda n: (0, 0, 0)),
            pl.BlockSpec((1, C), lambda n: (0, 0)),
            pl.BlockSpec((C, C), lambda n: (0, 0)),
            pl.BlockSpec((1, C), lambda n: (0, 0)),
        ],
        out_specs=pl.BlockSpec((1, HW, C), lambda n: (n, 0, 0)),
        scratch_shapes=[pltpu.VMEM((H + 2, W + 2, C), jnp.float32)],
        compiler_params=pltpu.CompilerParams(dimension_semantics=("parallel",)),
    )(spatial_features.astype(jnp.float32), w1, b1, w2, b2, wsh, bsh)


def _fusion_kernel(idx_ref, mask_ref, hmark_ref,                 # SMEM scalar prefetch
                   sf2d_ref, hist_ref, wc1_ref, wc2_ref, wh_ref, bh_ref,
                   fb_ref, feat_ref, head_ref):
    # Fused: regroup gather + history blend + FeatureCompensation + masked CAV-max
    # fusion + merged cls/reg heads.  Grid axis = batch.
    b = pl.program_id(0)
    L = hist_ref.shape[1]
    HW, C = sf2d_ref.shape[1], sf2d_ref.shape[2]

    hm = hmark_ref[b].astype(jnp.float32)            # history-mark gate for this batch
    fused = jnp.full((HW, C), -1e30, jnp.float32)
    any_valid = jnp.float32(0.0)

    for l in range(L):                               # L is tiny & static -> unrolled
        m = mask_ref[b * L + l].astype(jnp.float32)
        any_valid = jnp.maximum(any_valid, m)
        x = sf2d_ref[idx_ref[b * L + l]] * m         # regroup gather + CAV mask
        hist = hist_ref[0, l]                        # pre-masked history features
        xt = x * (1.0 - 0.5 * hm) + hist * (0.5 * hm)   # gated residual blend
        # FeatureCompensationNet: x + relu(x @ w1) @ w2
        h = jnp.maximum(jnp.dot(xt, wc1_ref[...],
                                preferred_element_type=jnp.float32), 0.0)
        comp = xt + jnp.dot(h, wc2_ref[...], preferred_element_type=jnp.float32)
        fb_ref[0, l] = comp
        # masked max fusion (multiplicative select keeps it pure VPU work)
        fused = jnp.maximum(fused, comp * m + (m - 1.0) * 1e30)

    fused = fused * any_valid                        # all-invalid batch -> zeros
    feat_ref[0] = fused
    head_ref[0] = (jnp.dot(fused, wh_ref[...], preferred_element_type=jnp.float32)
                   + bh_ref[...])                    # merged, lane-padded heads


def fusion_and_heads(sf2d, hist, idx, mask, history_mark,
                     w_c1, w_c2, w_head, b_head):
    """sf2d: (N, HW, C); hist: (B, L, HW, C) pre-masked; idx/mask: (B*L,) int32.
    Returns (feature_before_fusion (B,L,HW,C), fused (B,HW,C), heads (B,HW,HEAD_PAD))."""
    N, HW, C = sf2d.shape
    B, L = hist.shape[0], hist.shape[1]
    NH = w_head.shape[1]
    grid_spec = pltpu.PrefetchScalarGridSpec(
        num_scalar_prefetch=3,
        grid=(B,),
        in_specs=[
            pl.BlockSpec((N, HW, C), lambda b, *_: (0, 0, 0)),      # resident features
            pl.BlockSpec((1, L, HW, C), lambda b, *_: (b, 0, 0, 0)),
            pl.BlockSpec((C, C), lambda b, *_: (0, 0)),
            pl.BlockSpec((C, C), lambda b, *_: (0, 0)),
            pl.BlockSpec((C, NH), lambda b, *_: (0, 0)),
            pl.BlockSpec((1, NH), lambda b, *_: (0, 0)),
        ],
        out_specs=(
            pl.BlockSpec((1, L, HW, C), lambda b, *_: (b, 0, 0, 0)),
            pl.BlockSpec((1, HW, C), lambda b, *_: (b, 0, 0)),
            pl.BlockSpec((1, HW, NH), lambda b, *_: (b, 0, 0)),
        ),
    )
    return pl.pallas_call(
        _fusion_kernel,
        grid_spec=grid_spec,
        out_shape=(
            jax.ShapeDtypeStruct((B, L, HW, C), jnp.float32),
            jax.ShapeDtypeStruct((B, HW, C), jnp.float32),
            jax.ShapeDtypeStruct((B, HW, NH), jnp.float32),
        ),
        compiler_params=pltpu.CompilerParams(dimension_semantics=("parallel",)),
    )(idx, mask, history_mark, sf2d.astype(jnp.float32), hist.astype(jnp.float32),
      w_c1.astype(jnp.float32), w_c2.astype(jnp.float32),
      w_head.astype(jnp.float32), b_head.astype(jnp.float32))


# --------------------------------------------------------------------------
# Host-side glue
# --------------------------------------------------------------------------

def regroup_indices(record_len, max_cav):
    """Static regroup_vit bookkeeping on the host: gather indices + CAV mask."""
    B = len(record_len)
    offs = np.concatenate([[0], np.cumsum(record_len)]).astype(np.int32)
    idx = np.zeros((B, max_cav), np.int32)
    mask = np.zeros((B, max_cav), np.int32)
    for b in range(B):
        for l in range(min(int(record_len[b]), max_cav)):
            idx[b, l] = offs[b] + l
            mask[b, l] = 1
    return idx, mask


# --------------------------------------------------------------------------
# Model
# --------------------------------------------------------------------------

class PointPillarDiscoNetV2xdgpeNoisePallas:
    HEAD_PAD = 128   # pad merged cls+reg head output to a full 128-lane store

    def __init__(self, key, C=64, H=8, W=16, anchor_number=2,
                 voxel_size=(0.4, 0.4, 4.0), max_cav=2):
        self.C, self.H, self.W = C, H, W
        self.anchor_number = anchor_number
        self.vx, self.vy = voxel_size[0], voxel_size[1]
        self.max_cav = max_cav

        ks = jax.random.split(key, 10)
        s = 0.05
        self.w_pfn = s * jax.random.normal(ks[0], (10, C))            # PillarVFE PFN
        self.w_bb1 = s * jax.random.normal(ks[1], (3, 3, C, C))       # backbone (simplified)
        self.b_bb1 = jnp.zeros((C,))
        self.w_bb2 = s * jax.random.normal(ks[2], (3, 3, C, C))
        self.b_bb2 = jnp.zeros((C,))
        self.w_shrink = s * jax.random.normal(ks[3], (1, 1, C, C))    # shrink_conv
        self.b_shrink = jnp.zeros((C,))
        self.w_comp1 = s * jax.random.normal(ks[4], (C, C))           # feature_compensation
        self.w_comp2 = s * jax.random.normal(ks[5], (C, C))
        self.w_cls = s * jax.random.normal(ks[6], (1, 1, C, anchor_number))
        self.b_cls = jnp.zeros((anchor_number,))
        self.w_reg = s * jax.random.normal(ks[7], (1, 1, C, 7 * anchor_number))
        self.b_reg = jnp.zeros((7 * anchor_number,))

        # merged + lane-padded detection head (cls | reg | zero pad) -> single matmul
        n_head = anchor_number + 7 * anchor_number
        assert n_head <= self.HEAD_PAD
        w_head = jnp.zeros((C, self.HEAD_PAD), jnp.float32)
        w_head = w_head.at[:, :anchor_number].set(self.w_cls.reshape(C, anchor_number))
        w_head = w_head.at[:, anchor_number:n_head].set(
            self.w_reg.reshape(C, 7 * anchor_number))
        b_head = jnp.zeros((1, self.HEAD_PAD), jnp.float32)
        b_head = b_head.at[0, :anchor_number].set(self.b_cls)
        b_head = b_head.at[0, anchor_number:n_head].set(self.b_reg)
        self.w_head, self.b_head, self.n_head = w_head, b_head, n_head

    def forward(self, data_dict, history_spatial_features_2d):
        vf = data_dict['processed_lidar']['voxel_features']      # (V, P, 4)
        vc = data_dict['processed_lidar']['voxel_coords']        # (V, 4) [agent, z, y, x]
        vn = data_dict['processed_lidar']['voxel_num_points']    # (V,)
        record_len = data_dict['record_len']                     # host list
        record_len_history = data_dict['record_len_history']
        prior_encoding = data_dict['prior_encoding']             # (B, max_cav, 3)
        history_mark = data_dict['history_mark']                 # (B,)

        C, H, W = self.C, self.H, self.W
        HW = H * W
        A = self.anchor_number

        # ---- PillarVFE: point augmentation (glue) + PFN kernel (Pallas) ----
        V, P, _ = vf.shape
        pmask = (jnp.arange(P)[None, :] < vn[:, None]).astype(jnp.float32)[..., None]
        pts = vf * pmask
        cnt = jnp.maximum(vn.astype(jnp.float32), 1.0)[:, None]
        mean_xyz = jnp.sum(pts[..., :3], axis=1) / cnt
        f_cluster = vf[..., :3] - mean_xyz[:, None, :]
        cx = (vc[:, 3].astype(jnp.float32) + 0.5) * self.vx
        cy = (vc[:, 2].astype(jnp.float32) + 0.5) * self.vy
        centers = jnp.stack([cx, cy, jnp.zeros_like(cx)], axis=-1)
        f_center = vf[..., :3] - centers[:, None, :]
        feats10 = jnp.concatenate([vf, f_cluster, f_center], axis=-1) * pmask
        pillar_features = pillar_vfe_pfn(feats10, self.w_pfn)          # (V, C)

        # ---- PointPillarScatter (data-dependent scatter kept in JAX glue) ----
        N_agents = int(np.sum(record_len))
        flat = vc[:, 2] * W + vc[:, 3]
        canvas = jnp.zeros((N_agents, HW, C), jnp.float32)
        spatial_features = canvas.at[vc[:, 0], flat].set(pillar_features)  # (N, HW, C)

        # ---- fused BaseBEVBackbone (simplified) + shrink_conv: one Pallas call ----
        # TODO(synk): multi-stride downsample / deconv-upsample path of BaseBEVBackbone
        # not reproduced.
        spatial_features_2d = backbone_shrink(
            spatial_features, H, W, self.w_bb1, self.b_bb1,
            self.w_bb2, self.b_bb2, self.w_shrink, self.b_shrink)       # (N, HW, C)

        # ---- regroup_vit bookkeeping (host) + history regroup (glue gather) ----
        B = len(record_len)
        L = self.max_cav
        ridx, rmask = regroup_indices(record_len, L)
        hidx, hmask = regroup_indices(record_len_history, L)
        hist_nhwc = jnp.transpose(history_spatial_features_2d, (0, 2, 3, 1))
        hist = hist_nhwc[jnp.asarray(hidx.reshape(-1))].reshape(B, L, HW, C)
        hist = hist * jnp.asarray(hmask.reshape(B, L, 1, 1), jnp.float32)

        # prior_encoding is concatenated to / split from x_train in the reference and
        # only feeds the (untranslated) V2XTransformer fusion, so the masked-max
        # replacement does not consume it.
        # TODO(synk): STCM / ResidualBlockHistory / V2XTransformer fusion replaced by a
        # history-mark gated residual blend + masked CAV-max fusion.
        del prior_encoding

        # ---- fused regroup + history blend + compensation + max fusion + heads ----
        fb, fused, heads = fusion_and_heads(
            spatial_features_2d, hist,
            jnp.asarray(ridx.reshape(-1)), jnp.asarray(rmask.reshape(-1)),
            history_mark.astype(jnp.int32),
            self.w_comp1, self.w_comp2, self.w_head, self.b_head)

        x_train_compensation = fb.reshape(B * L, H, W, C)
        fusion_features_2d = fused.reshape(B, H, W, C)
        psm = heads[..., :A].reshape(B, H, W, A)
        rm = heads[..., A:self.n_head].reshape(B, H, W, 7 * A)

        output_dict = {
            'feature_before_fusion': jnp.transpose(x_train_compensation, (0, 3, 1, 2)),
            'feature': jnp.transpose(fusion_features_2d, (0, 3, 1, 2)),
            'cls_preds': jnp.transpose(psm, (0, 3, 1, 2)),
            'reg_preds': jnp.transpose(rm, (0, 3, 1, 2)),
        }
        return output_dict


# --------------------------------------------------------------------------
# Main
# --------------------------------------------------------------------------

if __name__ == "__main__":
    key = jax.random.PRNGKey(0)
    C, H, W, P, anchor, max_cav = 64, 8, 16, 8, 2, 2
    record_len = [2, 1]
    record_len_history = [2, 1]
    N_agents = int(np.sum(record_len))
    V_per_agent = 16
    V = N_agents * V_per_agent
    vx = vy = 0.4

    keys = jax.random.split(key, 10)

    # unique voxel cells per agent
    coords = []
    for a in range(N_agents):
        cells = jax.random.permutation(jax.random.fold_in(keys[0], a), H * W)[:V_per_agent]
        ys = (cells // W).astype(jnp.int32)
        xs = (cells % W).astype(jnp.int32)
        coords.append(jnp.stack([jnp.full_like(ys, a), jnp.zeros_like(ys), ys, xs], axis=-1))
    voxel_coords = jnp.concatenate(coords, axis=0).astype(jnp.int32)          # (V, 4)
    voxel_num_points = jax.random.randint(keys[1], (V,), 1, P + 1)

    cxs = (voxel_coords[:, 3].astype(jnp.float32) + 0.5) * vx
    cys = (voxel_coords[:, 2].astype(jnp.float32) + 0.5) * vy
    pts_xy = jnp.stack([cxs, cys], -1)[:, None, :] + 0.1 * vx * jax.random.normal(keys[2], (V, P, 2))
    pts_z = 0.2 * jax.random.normal(keys[3], (V, P, 1))
    intensity = jax.random.uniform(keys[4], (V, P, 1))
    voxel_features = jnp.concatenate([pts_xy, pts_z, intensity], axis=-1)     # (V, P, 4)

    B = len(record_len)
    prior_encoding = jax.random.uniform(keys[5], (B, max_cav, 3))
    history_mark = jnp.array([1, 0], jnp.int32)
    history_spatial_features_2d = 0.1 * jax.random.normal(
        keys[6], (int(np.sum(record_len_history)), C, H, W))                  # NCHW like the ref

    data_dict = {
        'processed_lidar': {
            'voxel_features': voxel_features,
            'voxel_coords': voxel_coords,
            'voxel_num_points': voxel_num_points,
        },
        'record_len': record_len,
        'record_len_history': record_len_history,
        'prior_encoding': prior_encoding,
        'history_mark': history_mark,
        # pairwise_t_matrix / spatial_correction_matrix feed only the (untranslated)
        # transformer fusion path.
    }

    model = PointPillarDiscoNetV2xdgpeNoisePallas(
        keys[7], C=C, H=H, W=W, anchor_number=anchor,
        voxel_size=(vx, vy, 4.0), max_cav=max_cav)

    out = model.forward(data_dict, history_spatial_features_2d)
    jax.block_until_ready(out)
    assert out['cls_preds'].shape == (B, anchor, H, W)
    assert out['reg_preds'].shape == (B, 7 * anchor, H, W)
    assert out['feature'].shape == (B, C, H, W)
    assert out['feature_before_fusion'].shape == (B * max_cav, C, H, W)
    print("KERNEL_OK")
</pallas_src>

<mosaic_0001>
module attributes {stable_mosaic.version = 11 : i64} {
  func.func @_pfn_kernel(%arg0: i32, %arg1: memref<384x10xf32, #tpu.memory_space<vmem>>, %arg2: memref<10x64xf32, #tpu.memory_space<vmem>>, %arg3: memref<48x64xf32, #tpu.memory_space<vmem>>) attributes {dimension_semantics = [#tpu.dimension_semantics<arbitrary>], iteration_bounds = array<i64: 1>, scalar_prefetch = 0 : i64, scratch_operands = 0 : i64, tpu.core_type = #tpu.core_type<tc>, window_params = [{pipeline_mode = #tpu.pipeline_mode<synchronous>, transform_indices = @transform_0, window_bounds = array<i64: 384, 10>}, {pipeline_mode = #tpu.pipeline_mode<synchronous>, transform_indices = @transform_1, window_bounds = array<i64: 10, 64>}, {pipeline_mode = #tpu.pipeline_mode<synchronous>, transform_indices = @transform_2, window_bounds = array<i64: 48, 64>}]} {
    %c0 = arith.constant 0 : index
    %c0_0 = arith.constant 0 : index
    %0 = vector.load %arg1[%c0, %c0_0] : memref<384x10xf32, #tpu.memory_space<vmem>>, vector<384x10xf32>
    %c0_1 = arith.constant 0 : index
    %c0_2 = arith.constant 0 : index
    %1 = vector.load %arg2[%c0_1, %c0_2] : memref<10x64xf32, #tpu.memory_space<vmem>>, vector<10x64xf32>
    %cst = arith.constant dense<0.000000e+00> : vector<384x64xf32>
    %2 = tpu.matmul %0, %1, %cst {dimension_numbers = #tpu.dot_dimension_numbers<[1], [0], [0], [1], [0, 0, 1, 1], [], []>} : vector<384x10xf32>, vector<10x64xf32>, vector<384x64xf32> -> vector<384x64xf32>
    %cst_3 = arith.constant 0.000000e+00 : f32
    %3 = vector.broadcast %cst_3 : f32 to vector<384x64xf32>
    %4 = arith.maximumf %2, %3 : vector<384x64xf32>
    %5 = vector.shape_cast %4 : vector<384x64xf32> to vector<48x8x64xf32>
    %cst_4 = arith.constant dense<0xFF800000> : vector<48x64xf32>
    %6 = vector.multi_reduction <maximumf>, %5, %cst_4 [1] : vector<48x8x64xf32> to vector<48x64xf32>
    %c0_5 = arith.constant 0 : index
    %c0_6 = arith.constant 0 : index
    %7 = vector.load %arg3[%c0_5, %c0_6] : memref<48x64xf32, #tpu.memory_space<vmem>>, vector<48x64xf32>
    tpu.vector_store %arg3[%c0_5, %c0_6], %6 {strides = array<i32>} : memref<48x64xf32, #tpu.memory_space<vmem>>, vector<48x64xf32>,
    return
  }
  func.func @transform_0(%arg0: i32) -> (i32, i32) {
    %c0_i32 = arith.constant 0 : i32
    %c0_i32_0 = arith.constant 0 : i32
    %c0_i32_1 = arith.constant 0 : i32
    return %c0_i32, %c0_i32_0 : i32, i32
  }
  func.func @transform_1(%arg0: i32) -> (i32, i32) {
    %c0_i32 = arith.constant 0 : i32
    %c0_i32_0 = arith.constant 0 : i32
    %c0_i32_1 = arith.constant 0 : i32
    return %c0_i32, %c0_i32_0 : i32, i32
  }
  func.func @transform_2(%arg0: i32) -> (i32, i32) {
    %c0_i32 = arith.constant 0 : i32
    %c0_i32_0 = arith.constant 0 : i32
    %c0_i32_1 = arith.constant 0 : i32
    return %c0_i32, %c0_i32_0 : i32, i32
  }
}

</mosaic_0001>

<llo_original>
// kernel: tpu_custom_call.1
$region0: #{tpu_custom_call.1}
  #allocation0 [shape = 'u32[]', space=smem, size = 0x4, offset = 0x4, fixed_abs, tag = 'smem constant byte address 0x4 - core index']
  #allocation1 [shape = 'u32[72,128]{1,0:T(1,128)}', space=vmem, size = 0x9000, scoped, tag = 'internal scratch']
  %s0 = inlined_call_operand.vmem [shape: f32[384,10], index: 0, kind: input, shape index: {}]
  %s1 = inlined_call_operand.vmem [shape: f32[10,64], index: 1, kind: input, shape index: {}]
  %s2 = inlined_call_operand.hbm [shape: f32[48,64], index: 2, kind: output, shape index: {}]
  %s3 = sld [smem:[#allocation0]]
  $region18: #{tpu_custom_call.1} parent=0
    _
  %s5 = ssub.s32 1, %s3
  %s6 = scalar_select 0, %s5, %s3
  $region1: #{tpu_custom_call.1} parent=0
    #allocation2 [shape = 'u8[24576]{0}', space=vmem, size = 0x6000, scoped, tag = 'output window, operand 0, single buffered']
    #allocation3 [shape = 's32[1]{0}', space=sflag, size = 0x4, scoped, tag = 'scoped memory for tpu_custom_call.1']
    %7 = vsyncpa [#allocation3], 0
    // Predicated region
    $region2: #{tpu_custom_call.1} parent=1 // pred_check
      _
    $region3: #{tpu_custom_call.1} parent=1 // pred_check_branch
      %9 = sbr.rel (0) target = $region5
    $region4: #{tpu_custom_call.1} parent=1 // pred_region
      _
    $region5: #{tpu_custom_call.1} parent=1 // pred_fallthru
      _
    // Predicated region
    $region6: #{tpu_custom_call.1} parent=1 // pred_check
      _
    $region7: #{tpu_custom_call.1} parent=1 // pred_check_branch
      %11 = sbr.rel (0) target = $region9
    $region8: #{tpu_custom_call.1} parent=1 // pred_region
      _
    $region9: #{tpu_custom_call.1} parent=1 // pred_fallthru
      _
    %v12 = vld [vmem:[%s0] sm:$0xff]
    %v13 = vld [vmem:[%s0 + $0x8] sm:$0xff]
    %v14 = vld [vmem:[%s0 + $0x10] sm:$0xff]
    %v15 = vld [vmem:[%s0 + $0x18] sm:$0xff]
    %v16 = vld [vmem:[%s0 + $0x20] sm:$0xff]
    %v17 = vld [vmem:[%s0 + $0x28] sm:$0xff]
    %v18 = vld [vmem:[%s0 + $0x30] sm:$0xff]
    %v19 = vld [vmem:[%s0 + $0x38] sm:$0xff]
    %v20 = vld [vmem:[%s0 + $0x40] sm:$0xff]
    %v21 = vld [vmem:[%s0 + $0x48] sm:$0xff]
    %v22 = vld [vmem:[%s0 + $0x50] sm:$0xff]
    %v23 = vld [vmem:[%s0 + $0x58] sm:$0xff]
    %v24 = vld [vmem:[%s0 + $0x60] sm:$0xff]
    %v25 = vld [vmem:[%s0 + $0x68] sm:$0xff]
    %v26 = vld [vmem:[%s0 + $0x70] sm:$0xff]
    %v27 = vld [vmem:[%s0 + $0x78] sm:$0xff]
    %v28 = vld [vmem:[%s0 + $0x80] sm:$0xff]
    %v29 = vld [vmem:[%s0 + $0x88] sm:$0xff]
    %v30 = vld [vmem:[%s0 + $0x90] sm:$0xff]
    %v31 = vld [vmem:[%s0 + $0x98] sm:$0xff]
    %v32 = vld [vmem:[%s0 + $0xa0] sm:$0xff]
    %v33 = vld [vmem:[%s0 + $0xa8] sm:$0xff]
    %v34 = vld [vmem:[%s0 + $0xb0] sm:$0xff]
    %v35 = vld [vmem:[%s0 + $0xb8] sm:$0xff]
    %v36 = vld [vmem:[%s0 + $0xc0] sm:$0xff]
    %v37 = vld [vmem:[%s0 + $0xc8] sm:$0xff]
    %v38 = vld [vmem:[%s0 + $0xd0] sm:$0xff]
    %v39 = vld [vmem:[%s0 + $0xd8] sm:$0xff]
    %v40 = vld [vmem:[%s0 + $0xe0] sm:$0xff]
    %v41 = vld [vmem:[%s0 + $0xe8] sm:$0xff]
    %v42 = vld [vmem:[%s0 + $0xf0] sm:$0xff]
    %v43 = vld [vmem:[%s0 + $0xf8] sm:$0xff]
    %v44 = vld [vmem:[%s0 + $0x100] sm:$0xff]
    %v45 = vld [vmem:[%s0 + $0x108] sm:$0xff]
    %v46 = vld [vmem:[%s0 + $0x110] sm:$0xff]
    %v47 = vld [vmem:[%s0 + $0x118] sm:$0xff]
    %v48 = vld [vmem:[%s0 + $0x120] sm:$0xff]
    %v49 = vld [vmem:[%s0 + $0x128] sm:$0xff]
    %v50 = vld [vmem:[%s0 + $0x130] sm:$0xff]
    %v51 = vld [vmem:[%s0 + $0x138] sm:$0xff]
    %v52 = vld [vmem:[%s0 + $0x140] sm:$0xff]
    %v53 = vld [vmem:[%s0 + $0x148] sm:$0xff]
    %v54 = vld [vmem:[%s0 + $0x150] sm:$0xff]
    %v55 = vld [vmem:[%s0 + $0x158] sm:$0xff]
    %v56 = vld [vmem:[%s0 + $0x160] sm:$0xff]
    %v57 = vld [vmem:[%s0 + $0x168] sm:$0xff]
    %v58 = vld [vmem:[%s0 + $0x170] sm:$0xff]
    %v59 = vld [vmem:[%s0 + $0x178] sm:$0xff]
    %v60 = vld [vmem:[%s1] sm:$0xff]
    %v61 = vld [vmem:[%s1 + $0x8] sm:$0x3]
    %vm62 = vcmask 80896
    %v64 = vsel %vm62, %v12, 0
    %v67 = vsel %vm62, %v13, 0
    %v70 = vsel %vm62, %v14, 0
    %v73 = vsel %vm62, %v15, 0
    %v76 = vsel %vm62, %v16, 0
    %v79 = vsel %vm62, %v17, 0
    %v82 = vsel %vm62, %v18, 0
    %v85 = vsel %vm62, %v19, 0
    %v88 = vsel %vm62, %v20, 0
    %v91 = vsel %vm62, %v21, 0
    %v94 = vsel %vm62, %v22, 0
    %v97 = vsel %vm62, %v23, 0
    %v100 = vsel %vm62, %v24, 0
    %v103 = vsel %vm62, %v25, 0
    %v106 = vsel %vm62, %v26, 0
    %v109 = vsel %vm62, %v27, 0
    %v112 = vsel %vm62, %v28, 0
    %v115 = vsel %vm62, %v29, 0
    %v118 = vsel %vm62, %v30, 0
    %v121 = vsel %vm62, %v31, 0
    %v124 = vsel %vm62, %v32, 0
    %v127 = vsel %vm62, %v33, 0
    %v130 = vsel %vm62, %v34, 0
    %v133 = vsel %vm62, %v35, 0
    %v136 = vsel %vm62, %v36, 0
    %v139 = vsel %vm62, %v37, 0
    %v142 = vsel %vm62, %v38, 0
    %v145 = vsel %vm62, %v39, 0
    %v148 = vsel %vm62, %v40, 0
    %v151 = vsel %vm62, %v41, 0
    %v154 = vsel %vm62, %v42, 0
    %v157 = vsel %vm62, %v43, 0
    %v160 = vsel %vm62, %v44, 0
    %v163 = vsel %vm62, %v45, 0
    %v166 = vsel %vm62, %v46, 0
    %v169 = vsel %vm62, %v47, 0
    %v172 = vsel %vm62, %v48, 0
    %v175 = vsel %vm62, %v49, 0
    %v178 = vsel %vm62, %v50, 0
    %v181 = vsel %vm62, %v51, 0
    %v184 = vsel %vm62, %v52, 0
    %v187 = vsel %vm62, %v53, 0
    %v190 = vsel %vm62, %v54, 0
    %v193 = vsel %vm62, %v55, 0
    %v196 = vsel %vm62, %v56, 0
    %v199 = vsel %vm62, %v57, 0
    %v202 = vsel %vm62, %v58, 0
    %v205 = vsel %vm62, %v59, 0
    %vm207 = vcmask 1041408
    %v209 = vsel %vm207, %v61, 0
    %211 = vmatpush.msra.mxu0 0.0
    %212 = vmatpush.msra.mxu0 0.0
    %213 = vmatpush.msra.mxu0 0.0
    %214 = vmatpush.msra.mxu0 0.0
    %215 = vmatpush.msra.mxu0 0.0
    %216 = vmatpush.msra.mxu0 0.0
    %217 = vmatpush.msra.mxu0 0.0
    %218 = vmatpush.msra.mxu0 0.0
    %219 = vmatpush.msra.mxu0 0.0
    %220 = vmatpush.msra.mxu0 0.0
    %221 = vmatpush.msra.mxu0 0.0
    %222 = vmatpush.msra.mxu0 0.0
    %223 = vmatpush.msra.mxu0 0.0
    %224 = vmatpush.msra.mxu0 0.0
    %225 = vmatpush.msra.mxu0 %v209
    %226 = vmatpush.msra.mxu0 %v60
    %227 = vmatmul.f32.gmra.mxu0 %v64
    %v228 = vpop.f32.mrf.mxu0
    %v229 = vadd.f32 0.0, %v228
    %230 = vmatmul.f32.gmra.mxu0 %v67
    %v231 = vpop.f32.mrf.mxu0
    %v232 = vadd.f32 0.0, %v231
    %233 = vmatmul.f32.gmra.mxu0 %v70
    %v234 = vpop.f32.mrf.mxu0
    %v235 = vadd.f32 0.0, %v234
    %236 = vmatmul.f32.gmra.mxu0 %v73
    %v237 = vpop.f32.mrf.mxu0
    %v238 = vadd.f32 0.0, %v237
    %239 = vmatmul.f32.gmra.mxu0 %v76
    %v240 = vpop.f32.mrf.mxu0
    %v241 = vadd.f32 0.0, %v240
    %242 = vmatmul.f32.gmra.mxu0 %v79
    %v243 = vpop.f32.mrf.mxu0
    %v244 = vadd.f32 0.0, %v243
    %245 = vmatmul.f32.gmra.mxu0 %v82
    %v246 = vpop.f32.mrf.mxu0
    %v247 = vadd.f32 0.0, %v246
    %248 = vmatmul.f32.gmra.mxu0 %v85
    %v249 = vpop.f32.mrf.mxu0
    %v250 = vadd.f32 0.0, %v249
    %251 = vmatmul.f32.gmra.mxu0 %v88
    %v252 = vpop.f32.mrf.mxu0
    %v253 = vadd.f32 0.0, %v252
    %254 = vmatmul.f32.gmra.mxu0 %v91
    %v255 = vpop.f32.mrf.mxu0
    %v256 = vadd.f32 0.0, %v255
    %257 = vmatmul.f32.gmra.mxu0 %v94
    %v258 = vpop.f32.mrf.mxu0
    %v259 = vadd.f32 0.0, %v258
    %260 = vmatmul.f32.gmra.mxu0 %v97
    %v261 = vpop.f32.mrf.mxu0
    %v262 = vadd.f32 0.0, %v261
    %263 = vmatmul.f32.gmra.mxu0 %v100
    %v264 = vpop.f32.mrf.mxu0
    %v265 = vadd.f32 0.0, %v264
    %266 = vmatmul.f32.gmra.mxu0 %v103
    %v267 = vpop.f32.mrf.mxu0
    %v268 = vadd.f32 0.0, %v267
    %269 = vmatmul.f32.gmra.mxu0 %v106
    %v270 = vpop.f32.mrf.mxu0
    %v271 = vadd.f32 0.0, %v270
    %272 = vmatmul.f32.gmra.mxu0 %v109
    %v273 = vpop.f32.mrf.mxu0
    %v274 = vadd.f32 0.0, %v273
    %275 = vmatmul.f32.gmra.mxu0 %v112
    %v276 = vpop.f32.mrf.mxu0
    %v277 = vadd.f32 0.0, %v276
    %278 = vmatmul.f32.gmra.mxu0 %v115
    %v279 = vpop.f32.mrf.mxu0
    %v280 = vadd.f32 0.0, %v279
    %281 = vmatmul.f32.gmra.mxu0 %v118
    %v282 = vpop.f32.mrf.mxu0
    %v283 = vadd.f32 0.0, %v282
    %284 = vmatmul.f32.gmra.mxu0 %v121
    %v285 = vpop.f32.mrf.mxu0
    %v286 = vadd.f32 0.0, %v285
    %287 = vmatmul.f32.gmra.mxu0 %v124
    %v288 = vpop.f32.mrf.mxu0
    %v289 = vadd.f32 0.0, %v288
    %290 = vmatmul.f32.gmra.mxu0 %v127
    %v291 = vpop.f32.mrf.mxu0
    %v292 = vadd.f32 0.0, %v291
    %293 = vmatmul.f32.gmra.mxu0 %v130
    %v294 = vpop.f32.mrf.mxu0
    %v295 = vadd.f32 0.0, %v294
    %296 = vmatmul.f32.gmra.mxu0 %v133
    %v297 = vpop.f32.mrf.mxu0
    %v298 = vadd.f32 0.0, %v297
    %299 = vmatmul.f32.gmra.mxu0 %v136
    %v300 = vpop.f32.mrf.mxu0
    %v301 = vadd.f32 0.0, %v300
    %302 = vmatmul.f32.gmra.mxu0 %v139
    %v303 = vpop.f32.mrf.mxu0
    %v304 = vadd.f32 0.0, %v303
    %305 = vmatmul.f32.gmra.mxu0 %v142
    %v306 = vpop.f32.mrf.mxu0
    %v307 = vadd.f32 0.0, %v306
    %308 = vmatmul.f32.gmra.mxu0 %v145
    %v309 = vpop.f32.mrf.mxu0
    %v310 = vadd.f32 0.0, %v309
    %311 = vmatmul.f32.gmra.mxu0 %v148
    %v312 = vpop.f32.mrf.mxu0
    %v313 = vadd.f32 0.0, %v312
    %314 = vmatmul.f32.gmra.mxu0 %v151
    %v315 = vpop.f32.mrf.mxu0
    %v316 = vadd.f32 0.0, %v315
    %317 = vmatmul.f32.gmra.mxu0 %v154
    %v318 = vpop.f32.mrf.mxu0
    %v319 = vadd.f32 0.0, %v318
    %320 = vmatmul.f32.gmra.mxu0 %v157
    %v321 = vpop.f32.mrf.mxu0
    %v322 = vadd.f32 0.0, %v321
    %323 = vmatmul.f32.gmra.mxu0 %v160
    %v324 = vpop.f32.mrf.mxu0
    %v325 = vadd.f32 0.0, %v324
    %326 = vmatmul.f32.gmra.mxu0 %v163
    %v327 = vpop.f32.mrf.mxu0
    %v328 = vadd.f32 0.0, %v327
    %329 = vmatmul.f32.gmra.mxu0 %v166
    %v330 = vpop.f32.mrf.mxu0
    %v331 = vadd.f32 0.0, %v330
    %332 = vmatmul.f32.gmra.mxu0 %v169
    %v333 = vpop.f32.mrf.mxu0
    %v334 = vadd.f32 0.0, %v333
    %335 = vmatmul.f32.gmra.mxu0 %v172
    %v336 = vpop.f32.mrf.mxu0
    %v337 = vadd.f32 0.0, %v336
    %338 = vmatmul.f32.gmra.mxu0 %v175
    %v339 = vpop.f32.mrf.mxu0
    %v340 = vadd.f32 0.0, %v339
    %341 = vmatmul.f32.gmra.mxu0 %v178
    %v342 = vpop.f32.mrf.mxu0
    %v343 = vadd.f32 0.0, %v342
    %344 = vmatmul.f32.gmra.mxu0 %v181
    %v345 = vpop.f32.mrf.mxu0
    %v346 = vadd.f32 0.0, %v345
    %347 = vmatmul.f32.gmra.mxu0 %v184
    %v348 = vpop.f32.mrf.mxu0
    %v349 = vadd.f32 0.0, %v348
    %350 = vmatmul.f32.gmra.mxu0 %v187
    %v351 = vpop.f32.mrf.mxu0
    %v352 = vadd.f32 0.0, %v351
    %353 = vmatmul.f32.gmra.mxu0 %v190
    %v354 = vpop.f32.mrf.mxu0
    %v355 = vadd.f32 0.0, %v354
    %356 = vmatmul.f32.gmra.mxu0 %v193
    %v357 = vpop.f32.mrf.mxu0
    %v358 = vadd.f32 0.0, %v357
    %359 = vmatmul.f32.gmra.mxu0 %v196
    %v360 = vpop.f32.mrf.mxu0
    %v361 = vadd.f32 0.0, %v360
    %362 = vmatmul.f32.gmra.mxu0 %v199
    %v363 = vpop.f32.mrf.mxu0
    %v364 = vadd.f32 0.0, %v363
    %365 = vmatmul.f32.gmra.mxu0 %v202
    %v366 = vpop.f32.mrf.mxu0
    %v367 = vadd.f32 0.0, %v366
    %368 = vmatmul.f32.gmra.mxu0 %v205
    %v369 = vpop.f32.mrf.mxu0
    %v370 = vadd.f32 0.0, %v369
    %371 = vdwg.mxu0
    %v372 = vmax.f32 %v229, 0.0
    %v373 = vmax.f32 %v232, 0.0
    %v374 = vmax.f32 %v235, 0.0
    %v375 = vmax.f32 %v238, 0.0
    %v376 = vmax.f32 %v241, 0.0
    %v377 = vmax.f32 %v244, 0.0
    %v378 = vmax.f32 %v247, 0.0
    %v379 = vmax.f32 %v250, 0.0
    %v380 = vmax.f32 %v253, 0.0
    %v381 = vmax.f32 %v256, 0.0
    %v382 = vmax.f32 %v259, 0.0
    %v383 = vmax.f32 %v262, 0.0
    %v384 = vmax.f32 %v265, 0.0
    %v385 = vmax.f32 %v268, 0.0
    %v386 = vmax.f32 %v271, 0.0
    %v387 = vmax.f32 %v274, 0.0
    %v388 = vmax.f32 %v277, 0.0
    %v389 = vmax.f32 %v280, 0.0
    %v390 = vmax.f32 %v283, 0.0
    %v391 = vmax.f32 %v286, 0.0
    %v392 = vmax.f32 %v289, 0.0
    %v393 = vmax.f32 %v292, 0.0
    %v394 = vmax.f32 %v295, 0.0
    %v395 = vmax.f32 %v298, 0.0
    %v396 = vmax.f32 %v301, 0.0
    %v397 = vmax.f32 %v304, 0.0
    %v398 = vmax.f32 %v307, 0.0
    %v399 = vmax.f32 %v310, 0.0
    %v400 = vmax.f32 %v313, 0.0
    %v401 = vmax.f32 %v316, 0.0
    %v402 = vmax.f32 %v319, 0.0
    %v403 = vmax.f32 %v322, 0.0
    %v404 = vmax.f32 %v325, 0.0
    %v405 = vmax.f32 %v328, 0.0
    %v406 = vmax.f32 %v331, 0.0
    %v407 = vmax.f32 %v334, 0.0
    %v408 = vmax.f32 %v337, 0.0
    %v409 = vmax.f32 %v340, 0.0
    %v410 = vmax.f32 %v343, 0.0
    %v411 = vmax.f32 %v346, 0.0
    %v412 = vmax.f32 %v349, 0.0
    %v413 = vmax.f32 %v352, 0.0
    %v414 = vmax.f32 %v355, 0.0
    %v415 = vmax.f32 %v358, 0.0
    %v416 = vmax.f32 %v361, 0.0
    %v417 = vmax.f32 %v364, 0.0
    %v418 = vmax.f32 %v367, 0.0
    %v419 = vmax.f32 %v370, 0.0
    %vm420 = vcmask 523264
    %v421 = vsel %vm420, %v372, -inf
    %v422 = vrot.slane %v421, 4
    %v423 = vmax.f32 %v421, %v422
    %v424 = vrot.slane %v423, 2
    %v425 = vmax.f32 %v423, %v424
    %v426 = vrot.slane %v425, 1
    %v427 = vmax.f32 %v425, %v426
    %v428 = vsel %vm420, %v373, -inf
    %v429 = vrot.slane %v428, 4
    %v430 = vmax.f32 %v428, %v429
    %v431 = vrot.slane %v430, 2
    %v432 = vmax.f32 %v430, %v431
    %v433 = vrot.slane %v432, 1
    %v434 = vmax.f32 %v432, %v433
    %v435 = vsel %vm420, %v374, -inf
    %v436 = vrot.slane %v435, 4
    %v437 = vmax.f32 %v435, %v436
    %v438 = vrot.slane %v437, 2
    %v439 = vmax.f32 %v437, %v438
    %v440 = vrot.slane %v439, 1
    %v441 = vmax.f32 %v439, %v440
    %v442 = vsel %vm420, %v375, -inf
    %v443 = vrot.slane %v442, 4
    %v444 = vmax.f32 %v442, %v443
    %v445 = vrot.slane %v444, 2
    %v446 = vmax.f32 %v444, %v445
    %v447 = vrot.slane %v446, 1
    %v448 = vmax.f32 %v446, %v447
    %v449 = vsel %vm420, %v376, -inf
    %v450 = vrot.slane %v449, 4
    %v451 = vmax.f32 %v449, %v450
    %v452 = vrot.slane %v451, 2
    %v453 = vmax.f32 %v451, %v452
    %v454 = vrot.slane %v453, 1
    %v455 = vmax.f32 %v453, %v454
    %v456 = vsel %vm420, %v377, -inf
    %v457 = vrot.slane %v456, 4
    %v458 = vmax.f32 %v456, %v457
    %v459 = vrot.slane %v458, 2
    %v460 = vmax.f32 %v458, %v459
    %v461 = vrot.slane %v460, 1
    %v462 = vmax.f32 %v460, %v461
    %v463 = vsel %vm420, %v378, -inf
    %v464 = vrot.slane %v463, 4
    %v465 = vmax.f32 %v463, %v464
    %v466 = vrot.slane %v465, 2
    %v467 = vmax.f32 %v465, %v466
    %v468 = vrot.slane %v467, 1
    %v469 = vmax.f32 %v467, %v468
    %v470 = vsel %vm420, %v379, -inf
    %v471 = vrot.slane %v470, 4
    %v472 = vmax.f32 %v470, %v471
    %v473 = vrot.slane %v472, 2
    %v474 = vmax.f32 %v472, %v473
    %v475 = vrot.slane %v474, 1
    %v476 = vmax.f32 %v474, %v475
    %v477 = vsel %vm420, %v380, -inf
    %v478 = vrot.slane %v477, 4
    %v479 = vmax.f32 %v477, %v478
    %v480 = vrot.slane %v479, 2
    %v481 = vmax.f32 %v479, %v480
    %v482 = vrot.slane %v481, 1
    %v483 = vmax.f32 %v481, %v482
    %v484 = vsel %vm420, %v381, -inf
    %v485 = vrot.slane %v484, 4
    %v486 = vmax.f32 %v484, %v485
    %v487 = vrot.slane %v486, 2
    %v488 = vmax.f32 %v486, %v487
    %v489 = vrot.slane %v488, 1
    %v490 = vmax.f32 %v488, %v489
    %v491 = vsel %vm420, %v382, -inf
    %v492 = vrot.slane %v491, 4
    %v493 = vmax.f32 %v491, %v492
    %v494 = vrot.slane %v493, 2
    %v495 = vmax.f32 %v493, %v494
    %v496 = vrot.slane %v495, 1
    %v497 = vmax.f32 %v495, %v496
    %v498 = vsel %vm420, %v383, -inf
    %v499 = vrot.slane %v498, 4
    %v500 = vmax.f32 %v498, %v499
    %v501 = vrot.slane %v500, 2
    %v502 = vmax.f32 %v500, %v501
    %v503 = vrot.slane %v502, 1
    %v504 = vmax.f32 %v502, %v503
    %v505 = vsel %vm420, %v384, -inf
    %v506 = vrot.slane %v505, 4
    %v507 = vmax.f32 %v505, %v506
    %v508 = vrot.slane %v507, 2
    %v509 = vmax.f32 %v507, %v508
    %v510 = vrot.slane %v509, 1
    %v511 = vmax.f32 %v509, %v510
    %v512 = vsel %vm420, %v385, -inf
    %v513 = vrot.slane %v512, 4
    %v514 = vmax.f32 %v512, %v513
    %v515 = vrot.slane %v514, 2
    %v516 = vmax.f32 %v514, %v515
    %v517 = vrot.slane %v516, 1
    %v518 = vmax.f32 %v516, %v517
    %v519 = vsel %vm420, %v386, -inf
    %v520 = vrot.slane %v519, 4
    %v521 = vmax.f32 %v519, %v520
    %v522 = vrot.slane %v521, 2
    %v523 = vmax.f32 %v521, %v522
    %v524 = vrot.slane %v523, 1
    %v525 = vmax.f32 %v523, %v524
    %v526 = vsel %vm420, %v387, -inf
    %v527 = vrot.slane %v526, 4
    %v528 = vmax.f32 %v526, %v527
    %v529 = vrot.slane %v528, 2
    %v530 = vmax.f32 %v528, %v529
    %v531 = vrot.slane %v530, 1
    %v532 = vmax.f32 %v530, %v531
    %v533 = vsel %vm420, %v388, -inf
    %v534 = vrot.slane %v533, 4
    %v535 = vmax.f32 %v533, %v534
    %v536 = vrot.slane %v535, 2
    %v537 = vmax.f32 %v535, %v536
    %v538 = vrot.slane %v537, 1
    %v539 = vmax.f32 %v537, %v538
    %v540 = vsel %vm420, %v389, -inf
    %v541 = vrot.slane %v540, 4
    %v542 = vmax.f32 %v540, %v541
    %v543 = vrot.slane %v542, 2
    %v544 = vmax.f32 %v542, %v543
    %v545 = vrot.slane %v544, 1
    %v546 = vmax.f32 %v544, %v545
    %v547 = vsel %vm420, %v390, -inf
    %v548 = vrot.slane %v547, 4
    %v549 = vmax.f32 %v547, %v548
    %v550 = vrot.slane %v549, 2
    %v551 = vmax.f32 %v549, %v550
    %v552 = vrot.slane %v551, 1
    %v553 = vmax.f32 %v551, %v552
    %v554 = vsel %vm420, %v391, -inf
    %v555 = vrot.slane %v554, 4
    %v556 = vmax.f32 %v554, %v555
    %v557 = vrot.slane %v556, 2
    %v558 = vmax.f32 %v556, %v557
    %v559 = vrot.slane %v558, 1
    %v560 = vmax.f32 %v558, %v559
    %v561 = vsel %vm420, %v392, -inf
    %v562 = vrot.slane %v561, 4
    %v563 = vmax.f32 %v561, %v562
    %v564 = vrot.slane %v563, 2
    %v565 = vmax.f32 %v563, %v564
    %v566 = vrot.slane %v565, 1
    %v567 = vmax.f32 %v565, %v566
    %v568 = vsel %vm420, %v393, -inf
    %v569 = vrot.slane %v568, 4
    %v570 = vmax.f32 %v568, %v569
    %v571 = vrot.slane %v570, 2
    %v572 = vmax.f32 %v570, %v571
    %v573 = vrot.slane %v572, 1
    %v574 = vmax.f32 %v572, %v573
    %v575 = vsel %vm420, %v394, -inf
    %v576 = vrot.slane %v575, 4
    %v577 = vmax.f32 %v575, %v576
    %v578 = vrot.slane %v577, 2
    %v579 = vmax.f32 %v577, %v578
    %v580 = vrot.slane %v579, 1
    %v581 = vmax.f32 %v579, %v580
    %v582 = vsel %vm420, %v395, -inf
    %v583 = vrot.slane %v582, 4
    %v584 = vmax.f32 %v582, %v583
    %v585 = vrot.slane %v584, 2
    %v586 = vmax.f32 %v584, %v585
    %v587 = vrot.slane %v586, 1
    %v588 = vmax.f32 %v586, %v587
    %v589 = vsel %vm420, %v396, -inf
    %v590 = vrot.slane %v589, 4
    %v591 = vmax.f32 %v589, %v590
    %v592 = vrot.slane %v591, 2
    %v593 = vmax.f32 %v591, %v592
    %v594 = vrot.slane %v593, 1
    %v595 = vmax.f32 %v593, %v594
    %v596 = vsel %vm420, %v397, -inf
    %v597 = vrot.slane %v596, 4
    %v598 = vmax.f32 %v596, %v597
    %v599 = vrot.slane %v598, 2
    %v600 = vmax.f32 %v598, %v599
    %v601 = vrot.slane %v600, 1
    %v602 = vmax.f32 %v600, %v601
    %v603 = vsel %vm420, %v398, -inf
    %v604 = vrot.slane %v603, 4
    %v605 = vmax.f32 %v603, %v604
    %v606 = vrot.slane %v605, 2
    %v607 = vmax.f32 %v605, %v606
    %v608 = vrot.slane %v607, 1
    %v609 = vmax.f32 %v607, %v608
    %v610 = vsel %vm420, %v399, -inf
    %v611 = vrot.slane %v610, 4
    %v612 = vmax.f32 %v610, %v611
    %v613 = vrot.slane %v612, 2
    %v614 = vmax.f32 %v612, %v613
    %v615 = vrot.slane %v614, 1
    %v616 = vmax.f32 %v614, %v615
    %v617 = vsel %vm420, %v400, -inf
    %v618 = vrot.slane %v617, 4
    %v619 = vmax.f32 %v617, %v618
    %v620 = vrot.slane %v619, 2
    %v621 = vmax.f32 %v619, %v620
    %v622 = vrot.slane %v621, 1
    %v623 = vmax.f32 %v621, %v622
    %v624 = vsel %vm420, %v401, -inf
    %v625 = vrot.slane %v624, 4
    %v626 = vmax.f32 %v624, %v625
    %v627 = vrot.slane %v626, 2
    %v628 = vmax.f32 %v626, %v627
    %v629 = vrot.slane %v628, 1
    %v630 = vmax.f32 %v628, %v629
    %v631 = vsel %vm420, %v402, -inf
    %v632 = vrot.slane %v631, 4
    %v633 = vmax.f32 %v631, %v632
    %v634 = vrot.slane %v633, 2
    %v635 = vmax.f32 %v633, %v634
    %v636 = vrot.slane %v635, 1
    %v637 = vmax.f32 %v635, %v636
    %v638 = vsel %vm420, %v403, -inf
    %v639 = vrot.slane %v638, 4
    %v640 = vmax.f32 %v638, %v639
    %v641 = vrot.slane %v640, 2
    %v642 = vmax.f32 %v640, %v641
    %v643 = vrot.slane %v642, 1
    %v644 = vmax.f32 %v642, %v643
    %v645 = vsel %vm420, %v404, -inf
    %v646 = vrot.slane %v645, 4
    %v647 = vmax.f32 %v645, %v646
    %v648 = vrot.slane %v647, 2
    %v649 = vmax.f32 %v647, %v648
    %v650 = vrot.slane %v649, 1
    %v651 = vmax.f32 %v649, %v650
    %v652 = vsel %vm420, %v405, -inf
    %v653 = vrot.slane %v652, 4
    %v654 = vmax.f32 %v652, %v653
    %v655 = vrot.slane %v654, 2
    %v656 = vmax.f32 %v654, %v655
    %v657 = vrot.slane %v656, 1
    %v658 = vmax.f32 %v656, %v657
    %v659 = vsel %vm420, %v406, -inf
    %v660 = vrot.slane %v659, 4
    %v661 = vmax.f32 %v659, %v660
    %v662 = vrot.slane %v661, 2
    %v663 = vmax.f32 %v661, %v662
    %v664 = vrot.slane %v663, 1
    %v665 = vmax.f32 %v663, %v664
    %v666 = vsel %vm420, %v407, -inf
    %v667 = vrot.slane %v666, 4
    %v668 = vmax.f32 %v666, %v667
    %v669 = vrot.slane %v668, 2
    %v670 = vmax.f32 %v668, %v669
    %v671 = vrot.slane %v670, 1
    %v672 = vmax.f32 %v670, %v671
    %v673 = vsel %vm420, %v408, -inf
    %v674 = vrot.slane %v673, 4
    %v675 = vmax.f32 %v673, %v674
    %v676 = vrot.slane %v675, 2
    %v677 = vmax.f32 %v675, %v676
    %v678 = vrot.slane %v677, 1
    %v679 = vmax.f32 %v677, %v678
    %v680 = vsel %vm420, %v409, -inf
    %v681 = vrot.slane %v680, 4
    %v682 = vmax.f32 %v680, %v681
    %v683 = vrot.slane %v682, 2
    %v684 = vmax.f32 %v682, %v683
    %v685 = vrot.slane %v684, 1
    %v686 = vmax.f32 %v684, %v685
    %v687 = vsel %vm420, %v410, -inf
    %v688 = vrot.slane %v687, 4
    %v689 = vmax.f32 %v687, %v688
    %v690 = vrot.slane %v689, 2
    %v691 = vmax.f32 %v689, %v690
    %v692 = vrot.slane %v691, 1
    %v693 = vmax.f32 %v691, %v692
    %v694 = vsel %vm420, %v411, -inf
    %v695 = vrot.slane %v694, 4
    %v696 = vmax.f32 %v694, %v695
    %v697 = vrot.slane %v696, 2
    %v698 = vmax.f32 %v696, %v697
    %v699 = vrot.slane %v698, 1
    %v700 = vmax.f32 %v698, %v699
    %v701 = vsel %vm420, %v412, -inf
    %v702 = vrot.slane %v701, 4
    %v703 = vmax.f32 %v701, %v702
    %v704 = vrot.slane %v703, 2
    %v705 = vmax.f32 %v703, %v704
    %v706 = vrot.slane %v705, 1
    %v707 = vmax.f32 %v705, %v706
    %v708 = vsel %vm420, %v413, -inf
    %v709 = vrot.slane %v708, 4
    %v710 = vmax.f32 %v708, %v709
    %v711 = vrot.slane %v710, 2
    %v712 = vmax.f32 %v710, %v711
    %v713 = vrot.slane %v712, 1
    %v714 = vmax.f32 %v712, %v713
    %v715 = vsel %vm420, %v414, -inf
    %v716 = vrot.slane %v715, 4
    %v717 = vmax.f32 %v715, %v716
    %v718 = vrot.slane %v717, 2
    %v719 = vmax.f32 %v717, %v718
    %v720 = vrot.slane %v719, 1
    %v721 = vmax.f32 %v719, %v720
    %v722 = vsel %vm420, %v415, -inf
    %v723 = vrot.slane %v722, 4
    %v724 = vmax.f32 %v722, %v723
    %v725 = vrot.slane %v724, 2
    %v726 = vmax.f32 %v724, %v725
    %v727 = vrot.slane %v726, 1
    %v728 = vmax.f32 %v726, %v727
    %v729 = vsel %vm420, %v416, -inf
    %v730 = vrot.slane %v729, 4
    %v731 = vmax.f32 %v729, %v730
    %v732 = vrot.slane %v731, 2
    %v733 = vmax.f32 %v731, %v732
    %v734 = vrot.slane %v733, 1
    %v735 = vmax.f32 %v733, %v734
    %v736 = vsel %vm420, %v417, -inf
    %v737 = vrot.slane %v736, 4
    %v738 = vmax.f32 %v736, %v737
    %v739 = vrot.slane %v738, 2
    %v740 = vmax.f32 %v738, %v739
    %v741 = vrot.slane %v740, 1
    %v742 = vmax.f32 %v740, %v741
    %v743 = vsel %vm420, %v418, -inf
    %v744 = vrot.slane %v743, 4
    %v745 = vmax.f32 %v743, %v744
    %v746 = vrot.slane %v745, 2
    %v747 = vmax.f32 %v745, %v746
    %v748 = vrot.slane %v747, 1
    %v749 = vmax.f32 %v747, %v748
    %v750 = vsel %vm420, %v419, -inf
    %v751 = vrot.slane %v750, 4
    %v752 = vmax.f32 %v750, %v751
    %v753 = vrot.slane %v752, 2
    %v754 = vmax.f32 %v752, %v753
    %v755 = vrot.slane %v754, 1
    %v756 = vmax.f32 %v754, %v755
    %vm805 = vcmask 1041409
    %v806 = vsel %vm805, %v434, %v427
    %vm807 = vcmask 1042434
    %v808 = vsel %vm807, %v441, %v806
    %vm809 = vcmask 1043459
    %v810 = vsel %vm809, %v448, %v808
    %vm811 = vcmask 1044484
    %v812 = vsel %vm811, %v455, %v810
    %vm813 = vcmask 1045509
    %v814 = vsel %vm813, %v462, %v812
    %vm815 = vcmask 1046534
    %v816 = vsel %vm815, %v469, %v814
    %vm817 = vcmask 1047559
    %v818 = vsel %vm817, %v476, %v816
    %v819 = vsel %vm805, %v490, %v483
    %v820 = vsel %vm807, %v497, %v819
    %v821 = vsel %vm809, %v504, %v820
    %v822 = vsel %vm811, %v511, %v821
    %v823 = vsel %vm813, %v518, %v822
    %v824 = vsel %vm815, %v525, %v823
    %v825 = vsel %vm817, %v532, %v824
    %v826 = vsel %vm805, %v546, %v539
    %v827 = vsel %vm807, %v553, %v826
    %v828 = vsel %vm809, %v560, %v827
    %v829 = vsel %vm811, %v567, %v828
    %v830 = vsel %vm813, %v574, %v829
    %v831 = vsel %vm815, %v581, %v830
    %v832 = vsel %vm817, %v588, %v831
    %v833 = vsel %vm805, %v602, %v595
    %v834 = vsel %vm807, %v609, %v833
    %v835 = vsel %vm809, %v616, %v834
    %v836 = vsel %vm811, %v623, %v835
    %v837 = vsel %vm813, %v630, %v836
    %v838 = vsel %vm815, %v637, %v837
    %v839 = vsel %vm817, %v644, %v838
    %v840 = vsel %vm805, %v658, %v651
    %v841 = vsel %vm807, %v665, %v840
    %v842 = vsel %vm809, %v672, %v841
    %v843 = vsel %vm811, %v679, %v842
    %v844 = vsel %vm813, %v686, %v843
    %v845 = vsel %vm815, %v693, %v844
    %v846 = vsel %vm817, %v700, %v845
    %v847 = vsel %vm805, %v714, %v707
    %v848 = vsel %vm807, %v721, %v847
    %v849 = vsel %vm809, %v728, %v848
    %v850 = vsel %vm811, %v735, %v849
    %v851 = vsel %vm813, %v742, %v850
    %v852 = vsel %vm815, %v749, %v851
    %v853 = vsel %vm817, %v756, %v852
    %860 = vst.msk [vmem:[#allocation2] sm:$0xff] %vm420, %v818
    %861 = vst.msk [vmem:[#allocation2 + $0x8] sm:$0xff] %vm420, %v825
    %862 = vst.msk [vmem:[#allocation2 + $0x10] sm:$0xff] %vm420, %v832
    %863 = vst.msk [vmem:[#allocation2 + $0x18] sm:$0xff] %vm420, %v839
    %864 = vst.msk [vmem:[#allocation2 + $0x20] sm:$0xff] %vm420, %v846
    %865 = vst.msk [vmem:[#allocation2 + $0x28] sm:$0xff] %vm420, %v853
    // Predicated region
    $region10: #{tpu_custom_call.1} parent=1 // pred_check
      _
    $region11: #{tpu_custom_call.1} parent=1 // pred_check_branch
      %867 = sbr.rel (0) target = $region13
    $region12: #{tpu_custom_call.1} parent=1 // pred_region
      %869 = vsyncadd [#allocation3], 0
      %s870 = sshll.u32 [#allocation2], 4
      %s871 = int_to_ptr.vmem [resolvable:$true] %s870
      %s872 = sshll.u32 %s2, 4
      %s873 = int_to_ptr.hbm [resolvable:$true] %s872
      %878 = dma.vmem_to_hbm [thread:$0]  %s871, 768, %s873, [#allocation3], 128, 128, 8
    $region13: #{tpu_custom_call.1} parent=1 // pred_fallthru
      _
    // Predicated region
    $region14: #{tpu_custom_call.1} parent=1 // pred_check
      _
    $region15: #{tpu_custom_call.1} parent=1 // pred_check_branch
      %880 = sbr.rel (0) target = $region17
    $region16: #{tpu_custom_call.1} parent=1 // pred_region
      %882 = dma.done [#allocation3], 768
    $region17: #{tpu_custom_call.1} parent=1 // pred_fallthru
      _
    %883 = vsyncpa [#allocation3], 1

</llo_original>
